<compile_context>
chip_gen: v7x
topology: tpu7x:2x2x1
jax: 0.10.0
libtpu: 0.0.40
codegen_flags: <defaults>
</compile_context>

<pallas_src>
from functools import partial

import jax
import jax.numpy as jnp
from jax.experimental import pallas as pl
from jax.experimental.pallas import tpu as pltpu

EPS = 1e-8


def _round_up(x, m):
    return -(-x // m) * m


def _make_koleo_kernel(n_total, tm, tk):
    """Build the kernel closed over static sizes (n_total, tm, tk)."""

    def kernel(q_ref, c_ref, out_ref, m_scr):
        # q_ref: (TM, D) bf16 pre-normalized query rows
        # c_ref: (TK, D) bf16 pre-normalized candidate rows
        # out_ref: (TM, 1) f32 per-row -log(dist + eps)
        # m_scr: (TM, 1) f32 running max dot across the column (k) sweep
        i = pl.program_id(0)
        k = pl.program_id(1)

        @pl.when(k == 0)
        def _init():
            m_scr[...] = jnp.full(m_scr.shape, -jnp.inf, dtype=m_scr.dtype)

        # bf16 MXU matmul with f32 accumulation: s[m, n] = <q[m], c[n]>.
        s = jax.lax.dot_general(
            q_ref[...], c_ref[...],
            dimension_numbers=(((1,), (1,)), ((), ())),
            preferred_element_type=jnp.float32)                    # (TM, TK)

        row0 = i * tm
        col0 = k * tk
        # Does this tile intersect the global diagonal, or hang past column N?
        has_diag = jnp.logical_and(row0 < col0 + tk, col0 < row0 + tm)
        has_tail = (col0 + tk) > n_total
        needs_mask = jnp.logical_or(has_diag, has_tail)

        @pl.when(jnp.logical_not(needs_mask))
        def _fast():
            # Mask-free fast path: no iotas / compares / selects.
            m_scr[...] = jnp.maximum(m_scr[...],
                                     jnp.max(s, axis=1, keepdims=True))

        @pl.when(needs_mask)
        def _masked():
            r = row0 + jax.lax.broadcasted_iota(jnp.int32, s.shape, 0)
            c = col0 + jax.lax.broadcasted_iota(jnp.int32, s.shape, 1)
            # Self-similarity (global diagonal) and out-of-range tail columns
            # are pushed below any achievable normalized dot product.
            bad = jnp.logical_or(r == c, c >= n_total)
            sm = jnp.where(bad, jnp.float32(-3.0), s)
            m_scr[...] = jnp.maximum(m_scr[...],
                                     jnp.max(sm, axis=1, keepdims=True))

        @pl.when(k == pl.num_programs(1) - 1)
        def _finalize():
            max_dot = m_scr[...]                                   # (TM, 1)
            # For unit-norm rows: ||x_i - x_NN(i)||^2 = 2 - 2 * max_dot.
            dist = jnp.sqrt(jnp.maximum(2.0 - 2.0 * max_dot, 0.0))
            out_ref[...] = (-jnp.log(dist + EPS)).astype(out_ref.dtype)

    return kernel


@partial(jax.jit, static_argnames=("tm_cap", "tk_cap"))
def koleo_loss(emg_latent, emg_parallel_latent, *, tm_cap=512, tk_cap=512):
    assert tm_cap % 8 == 0 and tk_cap % 128 == 0

    # Plain-JAX glue (matches torch): concat on last dim, flatten leading dims,
    # L2-normalize once (F.normalize == x / max(||x||, eps)), cast to bf16 so
    # the kernel streams half the bytes from HBM.
    joint = jnp.concatenate([emg_latent, emg_parallel_latent], axis=-1)
    d = joint.shape[-1]
    x = joint.reshape(-1, d).astype(jnp.float32)
    n = x.shape[0]

    norm = jnp.sqrt(jnp.sum(x * x, axis=-1, keepdims=True))
    xn = (x / jnp.maximum(norm, EPS)).astype(jnp.bfloat16)

    # Bounded, aligned tiles: TM multiple of 8, TK multiple of 128 (lane dim).
    tm = min(tm_cap, _round_up(n, 8))
    tk = min(tk_cap, _round_up(n, 128))
    grid = (pl.cdiv(n, tm), pl.cdiv(n, tk))

    per_row = pl.pallas_call(
        _make_koleo_kernel(n, tm, tk),
        out_shape=jax.ShapeDtypeStruct((n, 1), jnp.float32),
        grid_spec=pltpu.PrefetchScalarGridSpec(
            num_scalar_prefetch=0,
            grid=grid,
            in_specs=[
                pl.BlockSpec((tm, d), lambda i, k: (i, 0)),   # query rows
                pl.BlockSpec((tk, d), lambda i, k: (k, 0)),   # candidate rows
            ],
            out_specs=pl.BlockSpec((tm, 1), lambda i, k: (i, 0)),
            scratch_shapes=[pltpu.VMEM((tm, 1), jnp.float32)],
        ),
        compiler_params=pltpu.CompilerParams(
            dimension_semantics=("parallel", "arbitrary"),
            vmem_limit_bytes=48 * 1024 * 1024,
        ),
    )(xn, xn)

    # Final mean over N rows is trivial glue.
    return jnp.mean(per_row)


def _koleo_reference(emg_latent, emg_parallel_latent, eps=EPS):
    # Faithful plain-JAX translation of the PyTorch module, for validation.
    joint = jnp.concatenate([emg_latent, emg_parallel_latent], axis=-1)
    x = joint.reshape(-1, joint.shape[-1]).astype(jnp.float32)
    norm = jnp.sqrt(jnp.sum(x * x, axis=-1, keepdims=True))
    xn = x / jnp.maximum(norm, eps)
    n = xn.shape[0]
    dots = xn @ xn.T
    dots = jnp.where(jnp.eye(n, dtype=bool), -1.0, dots)
    nn_idx = jnp.argmax(dots, axis=1)
    diff = xn - xn[nn_idx] + eps
    dist = jnp.sqrt(jnp.sum(diff * diff, axis=-1))
    return -jnp.mean(jnp.log(dist + eps))


if __name__ == "__main__":
    key = jax.random.PRNGKey(0)
    k1, k2, k3, k4 = jax.random.split(key, 4)

    # Case 1: batch=2, seq=64, hidden=16 per latent -> joint D=32, N=128 rows.
    # Single (128, 128) tile, exact fit (fast path only).
    a1 = jax.random.normal(k1, (2, 64, 16), dtype=jnp.float32)
    b1 = jax.random.normal(k2, (2, 64, 16), dtype=jnp.float32)
    loss1 = koleo_loss(a1, b1)
    jax.block_until_ready(loss1)
    ref1 = _koleo_reference(a1, b1)

    # Case 2: N=192 with small tile caps to exercise the multi-block reduction,
    # the pl.when-guarded diagonal mask, and the column-tail masking path.
    a2 = jax.random.normal(k3, (2, 96, 16), dtype=jnp.float32)
    b2 = jax.random.normal(k4, (2, 96, 16), dtype=jnp.float32)
    loss2 = koleo_loss(a2, b2, tm_cap=64, tk_cap=128)
    jax.block_until_ready(loss2)
    ref2 = _koleo_reference(a2, b2)

    # Loose tolerance: similarities are computed from bf16-quantized inputs.
    ok = True
    for lv, rv in ((loss1, ref1), (loss2, ref2)):
        if (not bool(jnp.isfinite(lv))) or abs(float(lv) - float(rv)) > 5e-2:
            ok = False
    if not ok:
        raise SystemExit(
            f"MISMATCH: kernel=({float(loss1):.6f}, {float(loss2):.6f}) "
            f"ref=({float(ref1):.6f}, {float(ref2):.6f})")
    print("KERNEL_OK")
</pallas_src>

<mosaic_0001>
module attributes {stable_mosaic.version = 11 : i64} {
  func.func @kernel(%arg0: i32, %arg1: i32, %arg2: memref<128x32xbf16, #tpu.memory_space<vmem>>, %arg3: memref<128x32xbf16, #tpu.memory_space<vmem>>, %arg4: memref<128x1xf32, #tpu.memory_space<vmem>>, %arg5: memref<128x1xf32, #tpu.memory_space<vmem>>) attributes {dimension_semantics = [#tpu.dimension_semantics<parallel>, #tpu.dimension_semantics<arbitrary>], iteration_bounds = array<i64: 1, 1>, scalar_prefetch = 0 : i64, scratch_operands = 1 : i64, tpu.core_type = #tpu.core_type<tc>, window_params = [{transform_indices = @transform_0, window_bounds = array<i64: 128, 32>}, {transform_indices = @transform_1, window_bounds = array<i64: 128, 32>}, {transform_indices = @transform_2, window_bounds = array<i64: 128, 1>}]} {
    %c0_i32 = arith.constant 0 : i32
    %0 = arith.cmpi eq, %arg1, %c0_i32 : i32
    %1 = arith.extui %0 : i1 to i32
    %c0_i32_0 = arith.constant 0 : i32
    %2 = arith.cmpi ne, %1, %c0_i32_0 : i32
    scf.if %2 {
      %cst_13 = arith.constant 0xFF800000 : f32
      %24 = vector.broadcast %cst_13 : f32 to vector<128x1xf32>
      %c0_14 = arith.constant 0 : index
      %c0_15 = arith.constant 0 : index
      %25 = vector.load %arg5[%c0_14, %c0_15] : memref<128x1xf32, #tpu.memory_space<vmem>>, vector<128x1xf32>
      tpu.vector_store %arg5[%c0_14, %c0_15], %24 {strides = array<i32>} : memref<128x1xf32, #tpu.memory_space<vmem>>, vector<128x1xf32>,
    } else {
    }
    %c0 = arith.constant 0 : index
    %c0_1 = arith.constant 0 : index
    %3 = vector.load %arg2[%c0, %c0_1] : memref<128x32xbf16, #tpu.memory_space<vmem>>, vector<128x32xbf16>
    %c0_2 = arith.constant 0 : index
    %c0_3 = arith.constant 0 : index
    %4 = vector.load %arg3[%c0_2, %c0_3] : memref<128x32xbf16, #tpu.memory_space<vmem>>, vector<128x32xbf16>
    %cst = arith.constant dense<0.000000e+00> : vector<128x128xf32>
    %5 = tpu.matmul %3, %4, %cst {dimension_numbers = #tpu.dot_dimension_numbers<[1], [1], [0], [0], [0, 0, 1, 0], [], []>} : vector<128x32xbf16>, vector<128x32xbf16>, vector<128x128xf32> -> vector<128x128xf32>
    %c128_i32 = arith.constant 128 : i32
    %6 = arith.muli %arg0, %c128_i32 : i32
    %c128_i32_4 = arith.constant 128 : i32
    %7 = arith.muli %arg1, %c128_i32_4 : i32
    %c128_i32_5 = arith.constant 128 : i32
    %8 = arith.addi %7, %c128_i32_5 : i32
    %9 = arith.cmpi slt, %6, %8 : i32
    %c128_i32_6 = arith.constant 128 : i32
    %10 = arith.addi %6, %c128_i32_6 : i32
    %11 = arith.cmpi slt, %7, %10 : i32
    %12 = arith.andi %9, %11 : i1
    %c128_i32_7 = arith.constant 128 : i32
    %13 = arith.addi %7, %c128_i32_7 : i32
    %c128_i32_8 = arith.constant 128 : i32
    %14 = arith.cmpi sgt, %13, %c128_i32_8 : i32
    %15 = arith.ori %12, %14 : i1
    %true = arith.constant true
    %16 = arith.xori %15, %true : i1
    %17 = arith.extui %16 : i1 to i32
    %c0_i32_9 = arith.constant 0 : i32
    %18 = arith.cmpi ne, %17, %c0_i32_9 : i32
    scf.if %18 {
      %c0_13 = arith.constant 0 : index
      %c0_14 = arith.constant 0 : index
      %24 = vector.load %arg5[%c0_13, %c0_14] : memref<128x1xf32, #tpu.memory_space<vmem>>, vector<128x1xf32>
      %cst_15 = arith.constant dense<0xFF800000> : vector<128xf32>
      %25 = vector.multi_reduction <maximumf>, %5, %cst_15 [1] : vector<128x128xf32> to vector<128xf32>
      %26 = vector.shape_cast %25 : vector<128xf32> to vector<128x1xf32>
      %27 = arith.maximumf %24, %26 : vector<128x1xf32>
      %c0_16 = arith.constant 0 : index
      %c0_17 = arith.constant 0 : index
      %28 = vector.load %arg5[%c0_16, %c0_17] : memref<128x1xf32, #tpu.memory_space<vmem>>, vector<128x1xf32>
      tpu.vector_store %arg5[%c0_16, %c0_17], %27 {strides = array<i32>} : memref<128x1xf32, #tpu.memory_space<vmem>>, vector<128x1xf32>,
    } else {
    }
    %19 = arith.extui %15 : i1 to i32
    %c0_i32_10 = arith.constant 0 : i32
    %20 = arith.cmpi ne, %19, %c0_i32_10 : i32
    scf.if %20 {
      %24 = tpu.iota {dimensions = array<i32: 0>} : vector<128x128xi32>
      %25 = vector.broadcast %6 : i32 to vector<128x128xi32>
      %26 = arith.addi %25, %24 : vector<128x128xi32>
      %27 = tpu.iota {dimensions = array<i32: 1>} : vector<128x128xi32>
      %28 = vector.broadcast %7 : i32 to vector<128x128xi32>
      %29 = arith.addi %28, %27 : vector<128x128xi32>
      %30 = arith.cmpi eq, %26, %29 : vector<128x128xi32>
      %c128_i32_13 = arith.constant 128 : i32
      %31 = vector.broadcast %c128_i32_13 : i32 to vector<128x128xi32>
      %32 = arith.cmpi sge, %29, %31 : vector<128x128xi32>
      %33 = arith.ori %30, %32 : vector<128x128xi1>
      %cst_14 = arith.constant -3.000000e+00 : f32
      %34 = vector.broadcast %cst_14 : f32 to vector<128x128xf32>
      %35 = arith.select %33, %34, %5 : vector<128x128xi1>, vector<128x128xf32>
      %c0_15 = arith.constant 0 : index
      %c0_16 = arith.constant 0 : index
      %36 = vector.load %arg5[%c0_15, %c0_16] : memref<128x1xf32, #tpu.memory_space<vmem>>, vector<128x1xf32>
      %cst_17 = arith.constant dense<0xFF800000> : vector<128xf32>
      %37 = vector.multi_reduction <maximumf>, %35, %cst_17 [1] : vector<128x128xf32> to vector<128xf32>
      %38 = vector.shape_cast %37 : vector<128xf32> to vector<128x1xf32>
      %39 = arith.maximumf %36, %38 : vector<128x1xf32>
      %c0_18 = arith.constant 0 : index
      %c0_19 = arith.constant 0 : index
      %40 = vector.load %arg5[%c0_18, %c0_19] : memref<128x1xf32, #tpu.memory_space<vmem>>, vector<128x1xf32>
      tpu.vector_store %arg5[%c0_18, %c0_19], %39 {strides = array<i32>} : memref<128x1xf32, #tpu.memory_space<vmem>>, vector<128x1xf32>,
    } else {
    }
    %c0_i32_11 = arith.constant 0 : i32
    %21 = arith.cmpi eq, %arg1, %c0_i32_11 : i32
    %22 = arith.extui %21 : i1 to i32
    %c0_i32_12 = arith.constant 0 : i32
    %23 = arith.cmpi ne, %22, %c0_i32_12 : i32
    scf.if %23 {
      %c0_13 = arith.constant 0 : index
      %c0_14 = arith.constant 0 : index
      %24 = vector.load %arg5[%c0_13, %c0_14] : memref<128x1xf32, #tpu.memory_space<vmem>>, vector<128x1xf32>
      %cst_15 = arith.constant 2.000000e+00 : f32
      %25 = vector.broadcast %cst_15 : f32 to vector<128x1xf32>
      %26 = arith.mulf %25, %24 : vector<128x1xf32>
      %cst_16 = arith.constant 2.000000e+00 : f32
      %27 = vector.broadcast %cst_16 : f32 to vector<128x1xf32>
      %28 = arith.subf %27, %26 : vector<128x1xf32>
      %cst_17 = arith.constant 0.000000e+00 : f32
      %29 = vector.broadcast %cst_17 : f32 to vector<128x1xf32>
      %30 = arith.maximumf %28, %29 : vector<128x1xf32>
      %31 = math.sqrt %30 : vector<128x1xf32>
      %cst_18 = arith.constant 9.99999993E-9 : f32
      %32 = vector.broadcast %cst_18 : f32 to vector<128x1xf32>
      %33 = arith.addf %31, %32 : vector<128x1xf32>
      %34 = math.log %33 : vector<128x1xf32>
      %cst_19 = arith.constant 0.000000e+00 : f32
      %35 = vector.broadcast %cst_19 : f32 to vector<128x1xf32>
      %36 = arith.subf %35, %34 : vector<128x1xf32>
      %c0_20 = arith.constant 0 : index
      %c0_21 = arith.constant 0 : index
      %37 = vector.load %arg4[%c0_20, %c0_21] : memref<128x1xf32, #tpu.memory_space<vmem>>, vector<128x1xf32>
      tpu.vector_store %arg4[%c0_20, %c0_21], %36 {strides = array<i32>} : memref<128x1xf32, #tpu.memory_space<vmem>>, vector<128x1xf32>,
    } else {
    }
    return
  }
  func.func @transform_0(%arg0: i32, %arg1: i32) -> (i32, i32) {
    %c0_i32 = arith.constant 0 : i32
    %c0_i32_0 = arith.constant 0 : i32
    return %arg0, %c0_i32 : i32, i32
  }
  func.func @transform_1(%arg0: i32, %arg1: i32) -> (i32, i32) {
    %c0_i32 = arith.constant 0 : i32
    %c0_i32_0 = arith.constant 0 : i32
    return %arg1, %c0_i32 : i32, i32
  }
  func.func @transform_2(%arg0: i32, %arg1: i32) -> (i32, i32) {
    %c0_i32 = arith.constant 0 : i32
    %c0_i32_0 = arith.constant 0 : i32
    return %arg0, %c0_i32 : i32, i32
  }
}

</mosaic_0001>

<llo_original>
// kernel: koleo_loss.1
$region0: #{koleo_loss.1}
  #allocation0 [shape = 'u32[]', space=smem, size = 0x4, offset = 0x4, fixed_abs, tag = 'smem constant byte address 0x4 - core index']
  #allocation1 [shape = 'u32[144,128]{1,0:T(1,128)}', space=vmem, size = 0x12000, scoped, tag = 'internal scratch']
  #allocation2 [shape = 'f32[128,1]{1,0:T(8,128)}', space=vmem, size = 0x10000, scoped, tag = 'scratch operand']
  %s0 = inlined_call_operand.vmem [shape: bf16[128,32], index: 0, kind: input, shape index: {}, may-alias: {0,1}]
  %s1 = inlined_call_operand.vmem [shape: bf16[128,32], index: 1, kind: input, shape index: {}, may-alias: {0,1}]
  %s2 = inlined_call_operand.vmem [shape: f32[128,1], index: 2, kind: output, shape index: {}]
  %s3 = sld [smem:[#allocation0]]
  $region34: #{koleo_loss.1} parent=0
    _
  %s5 = ssub.s32 1, %s3
  %s6 = scalar_select 0, %s5, %s3
  // Predicated region
  $region2: #{koleo_loss.1} parent=0 // pred_check
    _
  $region3: #{koleo_loss.1} parent=0 // pred_check_branch
    %8 = sbr.rel (0) target = $region5
  $region4: #{koleo_loss.1} parent=0 // pred_region
    _
  $region5: #{koleo_loss.1} parent=0 // pred_fallthru
    _
  // Predicated region
  $region6: #{koleo_loss.1} parent=0 // pred_check
    _
  $region7: #{koleo_loss.1} parent=0 // pred_check_branch
    %10 = sbr.rel (0) target = $region9
  $region8: #{koleo_loss.1} parent=0 // pred_region
    _
  $region9: #{koleo_loss.1} parent=0 // pred_fallthru
    _
  %p12 = scmp.eq.s32.totalorder 0, 0
  // Predicated region
  $region10: #{koleo_loss.1} parent=0 // pred_check
    %p13 = pneg %p12
  $region11: #{koleo_loss.1} parent=0 // pred_check_branch
    %15 = sbr.rel (%p13) target = $region13
  $region12: #{koleo_loss.1} parent=0 // pred_region
    %vm16 = vcmask 7168
    %17 = vst.msk [vmem:[#allocation2] sm:$0xff] %vm16, -inf
    %18 = vst.msk [vmem:[#allocation2 + $0x8] sm:$0xff] %vm16, -inf
    %19 = vst.msk [vmem:[#allocation2 + $0x10] sm:$0xff] %vm16, -inf
    %20 = vst.msk [vmem:[#allocation2 + $0x18] sm:$0xff] %vm16, -inf
    %21 = vst.msk [vmem:[#allocation2 + $0x20] sm:$0xff] %vm16, -inf
    %22 = vst.msk [vmem:[#allocation2 + $0x28] sm:$0xff] %vm16, -inf
    %23 = vst.msk [vmem:[#allocation2 + $0x30] sm:$0xff] %vm16, -inf
    %24 = vst.msk [vmem:[#allocation2 + $0x38] sm:$0xff] %vm16, -inf
    %25 = vst.msk [vmem:[#allocation2 + $0x40] sm:$0xff] %vm16, -inf
    %26 = vst.msk [vmem:[#allocation2 + $0x48] sm:$0xff] %vm16, -inf
    %27 = vst.msk [vmem:[#allocation2 + $0x50] sm:$0xff] %vm16, -inf
    %28 = vst.msk [vmem:[#allocation2 + $0x58] sm:$0xff] %vm16, -inf
    %29 = vst.msk [vmem:[#allocation2 + $0x60] sm:$0xff] %vm16, -inf
    %30 = vst.msk [vmem:[#allocation2 + $0x68] sm:$0xff] %vm16, -inf
    %31 = vst.msk [vmem:[#allocation2 + $0x70] sm:$0xff] %vm16, -inf
    %32 = vst.msk [vmem:[#allocation2 + $0x78] sm:$0xff] %vm16, -inf
  $region13: #{koleo_loss.1} parent=0 // pred_fallthru
    _
  %v33 = vld [vmem:[%s0] sm:$0xf]
  %v34 = vld [vmem:[%s0 + $0x4] sm:$0xf]
  %v35 = vld [vmem:[%s0 + $0x8] sm:$0xf]
  %v36 = vld [vmem:[%s0 + $0xc] sm:$0xf]
  %v37 = vld [vmem:[%s0 + $0x10] sm:$0xf]
  %v38 = vld [vmem:[%s0 + $0x14] sm:$0xf]
  %v39 = vld [vmem:[%s0 + $0x18] sm:$0xf]
  %v40 = vld [vmem:[%s0 + $0x1c] sm:$0xf]
  %v41 = vld [vmem:[%s0 + $0x20] sm:$0xf]
  %v42 = vld [vmem:[%s0 + $0x24] sm:$0xf]
  %v43 = vld [vmem:[%s0 + $0x28] sm:$0xf]
  %v44 = vld [vmem:[%s0 + $0x2c] sm:$0xf]
  %v45 = vld [vmem:[%s0 + $0x30] sm:$0xf]
  %v46 = vld [vmem:[%s0 + $0x34] sm:$0xf]
  %v47 = vld [vmem:[%s0 + $0x38] sm:$0xf]
  %v48 = vld [vmem:[%s0 + $0x3c] sm:$0xf]
  %v49 = vld [vmem:[%s1] sm:$0xf]
  %v50 = vld [vmem:[%s1 + $0x4] sm:$0xf]
  %v51 = vld [vmem:[%s1 + $0x8] sm:$0xf]
  %v52 = vld [vmem:[%s1 + $0xc] sm:$0xf]
  %v53 = vld [vmem:[%s1 + $0x10] sm:$0xf]
  %v54 = vld [vmem:[%s1 + $0x14] sm:$0xf]
  %v55 = vld [vmem:[%s1 + $0x18] sm:$0xf]
  %v56 = vld [vmem:[%s1 + $0x1c] sm:$0xf]
  %v57 = vld [vmem:[%s1 + $0x20] sm:$0xf]
  %v58 = vld [vmem:[%s1 + $0x24] sm:$0xf]
  %v59 = vld [vmem:[%s1 + $0x28] sm:$0xf]
  %v60 = vld [vmem:[%s1 + $0x2c] sm:$0xf]
  %v61 = vld [vmem:[%s1 + $0x30] sm:$0xf]
  %v62 = vld [vmem:[%s1 + $0x34] sm:$0xf]
  %v63 = vld [vmem:[%s1 + $0x38] sm:$0xf]
  %v64 = vld [vmem:[%s1 + $0x3c] sm:$0xf]
  %v81 = vunpack.c.l.b16 %v33
  %v82 = vunpack.c.l.b16 %v34
  %v83 = vunpack.c.l.b16 %v35
  %v84 = vunpack.c.l.b16 %v36
  %v85 = vunpack.c.l.b16 %v37
  %v86 = vunpack.c.l.b16 %v38
  %v87 = vunpack.c.l.b16 %v39
  %v88 = vunpack.c.l.b16 %v40
  %v89 = vunpack.c.l.b16 %v41
  %v90 = vunpack.c.l.b16 %v42
  %v91 = vunpack.c.l.b16 %v43
  %v92 = vunpack.c.l.b16 %v44
  %v93 = vunpack.c.l.b16 %v45
  %v94 = vunpack.c.l.b16 %v46
  %v95 = vunpack.c.l.b16 %v47
  %v96 = vunpack.c.l.b16 %v48
  %v97 = vpack.c.b16 %v82, %v81
  %v98 = vpack.c.b16 %v84, %v83
  %v99 = vpack.c.b16 %v86, %v85
  %v100 = vpack.c.b16 %v88, %v87
  %v101 = vpack.c.b16 %v90, %v89
  %v102 = vpack.c.b16 %v92, %v91
  %v103 = vpack.c.b16 %v94, %v93
  %v104 = vpack.c.b16 %v96, %v95
  %v121 = vunpack.c.l.b16 %v49
  %v122 = vunpack.c.l.b16 %v50
  %v123 = vunpack.c.l.b16 %v51
  %v124 = vunpack.c.l.b16 %v52
  %v125 = vunpack.c.l.b16 %v53
  %v126 = vunpack.c.l.b16 %v54
  %v127 = vunpack.c.l.b16 %v55
  %v128 = vunpack.c.l.b16 %v56
  %v129 = vunpack.c.l.b16 %v57
  %v130 = vunpack.c.l.b16 %v58
  %v131 = vunpack.c.l.b16 %v59
  %v132 = vunpack.c.l.b16 %v60
  %v133 = vunpack.c.l.b16 %v61
  %v134 = vunpack.c.l.b16 %v62
  %v135 = vunpack.c.l.b16 %v63
  %v136 = vunpack.c.l.b16 %v64
  %v137 = vpack.c.b16 %v122, %v121
  %v138 = vpack.c.b16 %v124, %v123
  %v139 = vpack.c.b16 %v126, %v125
  %v140 = vpack.c.b16 %v128, %v127
  %v141 = vpack.c.b16 %v130, %v129
  %v142 = vpack.c.b16 %v132, %v131
  %v143 = vpack.c.b16 %v134, %v133
  %v144 = vpack.c.b16 %v136, %v135
  %vm145 = vcmask 261120
  %v147 = vsel %vm145, %v97, 0
  %v150 = vsel %vm145, %v98, 0
  %v153 = vsel %vm145, %v99, 0
  %v156 = vsel %vm145, %v100, 0
  %v159 = vsel %vm145, %v101, 0
  %v162 = vsel %vm145, %v102, 0
  %v165 = vsel %vm145, %v103, 0
  %v168 = vsel %vm145, %v104, 0
  %v171 = vsel %vm145, %v137, 0
  %v174 = vsel %vm145, %v138, 0
  %v177 = vsel %vm145, %v139, 0
  %v180 = vsel %vm145, %v140, 0
  %v183 = vsel %vm145, %v141, 0
  %v186 = vsel %vm145, %v142, 0
  %v189 = vsel %vm145, %v143, 0
  %v192 = vsel %vm145, %v144, 0
  %194 = vmatprep.subr.bf16.mxu0 0
  %195 = vmatpush1.bf16.xpose.msra.mxu0 %v171
  %196 = vmatprep.subr.bf16.mxu0 0
  %197 = vmatpush1.bf16.xpose.msra.mxu0 %v174
  %198 = vmatprep.subr.bf16.mxu0 0
  %199 = vmatpush1.bf16.xpose.msra.mxu0 %v177
  %200 = vmatprep.subr.bf16.mxu0 0
  %201 = vmatpush1.bf16.xpose.msra.mxu0 %v180
  %202 = vmatprep.subr.bf16.mxu0 0
  %203 = vmatpush1.bf16.xpose.msra.mxu0 %v183
  %204 = vmatprep.subr.bf16.mxu0 0
  %205 = vmatpush1.bf16.xpose.msra.mxu0 %v186
  %206 = vmatprep.subr.bf16.mxu0 0
  %207 = vmatpush1.bf16.xpose.msra.mxu0 %v189
  %208 = vmatprep.subr.bf16.mxu0 0
  %209 = vmatpush1.bf16.xpose.msra.mxu0 %v192
  %210 = vmatprep.subr.bf16.mxu0 0
  %211 = vmatpush1.bf16.xpose.msra.mxu0 0
  %212 = vmatprep.subr.bf16.mxu0 0
  %213 = vmatpush1.bf16.xpose.msra.mxu0 0
  %214 = vmatprep.subr.bf16.mxu0 0
  %215 = vmatpush1.bf16.xpose.msra.mxu0 0
  %216 = vmatprep.subr.bf16.mxu0 0
  %217 = vmatpush1.bf16.xpose.msra.mxu0 0
  %218 = vmatprep.subr.bf16.mxu0 0
  %219 = vmatpush1.bf16.xpose.msra.mxu0 0
  %220 = vmatprep.subr.bf16.mxu0 0
  %221 = vmatpush1.bf16.xpose.msra.mxu0 0
  %222 = vmatprep.subr.bf16.mxu0 0
  %223 = vmatpush1.bf16.xpose.msra.mxu0 0
  %224 = vmatprep.subr.bf16.mxu0 0
  %225 = vmatpush1.bf16.xpose.msra.mxu0 0
  %226 = vmatprep.mubr.bf16.mxu0 0
  %227 = vmatmul.mubr.bf16.gmra.mrb[0].mxu0 %v147
  %v228 = vpop.f32.mrb[0].mxu0
  %v229 = vadd.f32 0.0, %v228
  %v230 = vpop.f32.mrb[0].mxu0
  %v231 = vpop.f32.mrb[0].mxu0
  %v232 = vadd.f32 0.0, %v231
  %v233 = vpop.f32.mrb[0].mxu0
  %234 = vmatprep.mubr.bf16.mxu0 0
  %235 = vmatmul.mubr.bf16.gmra.mrb[0].mxu0 %v150
  %v236 = vpop.f32.mrb[0].mxu0
  %v237 = vadd.f32 0.0, %v236
  %v238 = vpop.f32.mrb[0].mxu0
  %v239 = vpop.f32.mrb[0].mxu0
  %v240 = vadd.f32 0.0, %v239
  %v241 = vpop.f32.mrb[0].mxu0
  %242 = vmatprep.mubr.bf16.mxu0 0
  %243 = vmatmul.mubr.bf16.gmra.mrb[0].mxu0 %v153
  %v244 = vpop.f32.mrb[0].mxu0
  %v245 = vadd.f32 0.0, %v244
  %v246 = vpop.f32.mrb[0].mxu0
  %v247 = vpop.f32.mrb[0].mxu0
  %v248 = vadd.f32 0.0, %v247
  %v249 = vpop.f32.mrb[0].mxu0
  %250 = vmatprep.mubr.bf16.mxu0 0
  %251 = vmatmul.mubr.bf16.gmra.mrb[0].mxu0 %v156
  %v252 = vpop.f32.mrb[0].mxu0
  %v253 = vadd.f32 0.0, %v252
  %v254 = vpop.f32.mrb[0].mxu0
  %v255 = vpop.f32.mrb[0].mxu0
  %v256 = vadd.f32 0.0, %v255
  %v257 = vpop.f32.mrb[0].mxu0
  %258 = vmatprep.mubr.bf16.mxu0 0
  %259 = vmatmul.mubr.bf16.gmra.mrb[0].mxu0 %v159
  %v260 = vpop.f32.mrb[0].mxu0
  %v261 = vadd.f32 0.0, %v260
  %v262 = vpop.f32.mrb[0].mxu0
  %v263 = vpop.f32.mrb[0].mxu0
  %v264 = vadd.f32 0.0, %v263
  %v265 = vpop.f32.mrb[0].mxu0
  %266 = vmatprep.mubr.bf16.mxu0 0
  %267 = vmatmul.mubr.bf16.gmra.mrb[0].mxu0 %v162
  %v268 = vpop.f32.mrb[0].mxu0
  %v269 = vadd.f32 0.0, %v268
  %v270 = vpop.f32.mrb[0].mxu0
  %v271 = vpop.f32.mrb[0].mxu0
  %v272 = vadd.f32 0.0, %v271
  %v273 = vpop.f32.mrb[0].mxu0
  %274 = vmatprep.mubr.bf16.mxu0 0
  %275 = vmatmul.mubr.bf16.gmra.mrb[0].mxu0 %v165
  %v276 = vpop.f32.mrb[0].mxu0
  %v277 = vadd.f32 0.0, %v276
  %v278 = vpop.f32.mrb[0].mxu0
  %v279 = vpop.f32.mrb[0].mxu0
  %v280 = vadd.f32 0.0, %v279
  %v281 = vpop.f32.mrb[0].mxu0
  %282 = vmatprep.mubr.bf16.mxu0 0
  %283 = vmatmul.mubr.bf16.gmra.mrb[0].mxu0 %v168
  %v284 = vpop.f32.mrb[0].mxu0
  %v285 = vadd.f32 0.0, %v284
  %v286 = vpop.f32.mrb[0].mxu0
  %v287 = vpop.f32.mrb[0].mxu0
  %v288 = vadd.f32 0.0, %v287
  %v289 = vpop.f32.mrb[0].mxu0
  %290 = vdwg.mxu0
  %s291 = smul.u32 0, 128
  %s292 = smul.u32 0, 128
  %s293 = sadd.s32 %s292, 128
  %p294 = scmp.lt.s32.totalorder %s291, %s293
  %s295 = sadd.s32 %s291, 128
  %p296 = scmp.lt.s32.totalorder %s292, %s295
  %p297 = pnand %p294, %p296
  %p298 = pneg %p297
  %p299 = scmp.gt.s32.totalorder %s293, 128
  %p300 = por %p298, %p299
  // Predicated region
  $region14: #{koleo_loss.1} parent=0 // pred_check
    %p301 = pneg %p300
  $region15: #{koleo_loss.1} parent=0 // pred_check_branch
    %303 = sbr.rel (%p301) target = $region17
  $region16: #{koleo_loss.1} parent=0 // pred_region
    %v304 = vlaneseq
    %v305 = vshrl.u32 %v304, 7
    %v306 = vadd.s32 %v305, 8
    %v307 = vadd.s32 %v305, 16
    %v308 = vadd.s32 %v305, 24
    %v309 = vadd.s32 %v305, 32
    %v310 = vadd.s32 %v305, 40
    %v311 = vadd.s32 %v305, 48
    %v312 = vadd.s32 %v305, 56
    %v313 = vadd.s32 %v305, 64
    %v314 = vadd.s32 %v305, 72
    %v315 = vadd.s32 %v305, 80
    %v316 = vadd.s32 %v305, 88
    %v317 = vadd.s32 %v305, 96
    %v318 = vadd.s32 %v305, 104
    %v319 = vadd.s32 %v305, 112
    %v320 = vadd.s32 %v305, 120
    %v321 = vstv %s291
    %v322 = vadd.s32 %v321, %v305
    %v323 = vadd.s32 %v321, %v306
    %v324 = vadd.s32 %v321, %v307
    %v325 = vadd.s32 %v321, %v308
    %v326 = vadd.s32 %v321, %v309
    %v327 = vadd.s32 %v321, %v310
    %v328 = vadd.s32 %v321, %v311
    %v329 = vadd.s32 %v321, %v312
    %v330 = vadd.s32 %v321, %v313
    %v331 = vadd.s32 %v321, %v314
    %v332 = vadd.s32 %v321, %v315
    %v333 = vadd.s32 %v321, %v316
    %v334 = vadd.s32 %v321, %v317
    %v335 = vadd.s32 %v321, %v318
    %v336 = vadd.s32 %v321, %v319
    %v337 = vadd.s32 %v321, %v320
    %v338 = vlaneseq
    %v339 = vand.u32 %v338, 127
    %v340 = vstv %s292
    %v341 = vadd.s32 %v340, %v339
    %vm342 = vcmp.eq.s32.totalorder %v322, %v341
    %vm343 = vcmp.eq.s32.totalorder %v323, %v341
    %vm344 = vcmp.eq.s32.totalorder %v324, %v341
    %vm345 = vcmp.eq.s32.totalorder %v325, %v341
    %vm346 = vcmp.eq.s32.totalorder %v326, %v341
    %vm347 = vcmp.eq.s32.totalorder %v327, %v341
    %vm348 = vcmp.eq.s32.totalorder %v328, %v341
    %vm349 = vcmp.eq.s32.totalorder %v329, %v341
    %vm350 = vcmp.eq.s32.totalorder %v330, %v341
    %vm351 = vcmp.eq.s32.totalorder %v331, %v341
    %vm352 = vcmp.eq.s32.totalorder %v332, %v341
    %vm353 = vcmp.eq.s32.totalorder %v333, %v341
    %vm354 = vcmp.eq.s32.totalorder %v334, %v341
    %vm355 = vcmp.eq.s32.totalorder %v335, %v341
    %vm356 = vcmp.eq.s32.totalorder %v336, %v341
    %vm357 = vcmp.eq.s32.totalorder %v337, %v341
    %vm358 = vcmp.ge.s32.totalorder %v341, 128
    %vm359 = vmor %vm342, %vm358
    %vm360 = vmor %vm343, %vm358
    %vm361 = vmor %vm344, %vm358
    %vm362 = vmor %vm345, %vm358
    %vm363 = vmor %vm346, %vm358
    %vm364 = vmor %vm347, %vm358
    %vm365 = vmor %vm348, %vm358
    %vm366 = vmor %vm349, %vm358
    %vm367 = vmor %vm350, %vm358
    %vm368 = vmor %vm351, %vm358
    %vm369 = vmor %vm352, %vm358
    %vm370 = vmor %vm353, %vm358
    %vm371 = vmor %vm354, %vm358
    %vm372 = vmor %vm355, %vm358
    %vm373 = vmor %vm356, %vm358
    %vm374 = vmor %vm357, %vm358
    %v375 = vsel %vm359, -3.0, %v229
    %v376 = vsel %vm360, -3.0, %v232
    %v377 = vsel %vm361, -3.0, %v237
    %v378 = vsel %vm362, -3.0, %v240
    %v379 = vsel %vm363, -3.0, %v245
    %v380 = vsel %vm364, -3.0, %v248
    %v381 = vsel %vm365, -3.0, %v253
    %v382 = vsel %vm366, -3.0, %v256
    %v383 = vsel %vm367, -3.0, %v261
    %v384 = vsel %vm368, -3.0, %v264
    %v385 = vsel %vm369, -3.0, %v269
    %v386 = vsel %vm370, -3.0, %v272
    %v387 = vsel %vm371, -3.0, %v277
    %v388 = vsel %vm372, -3.0, %v280
    %v389 = vsel %vm373, -3.0, %v285
    %v390 = vsel %vm374, -3.0, %v288
    %v391 = vld [vmem:[#allocation2] sm:$0xff]
    %v392 = vld [vmem:[#allocation2 + $0x8] sm:$0xff]
    %v393 = vld [vmem:[#allocation2 + $0x10] sm:$0xff]
    %v394 = vld [vmem:[#allocation2 + $0x18] sm:$0xff]
    %v395 = vld [vmem:[#allocation2 + $0x20] sm:$0xff]
    %v396 = vld [vmem:[#allocation2 + $0x28] sm:$0xff]
    %v397 = vld [vmem:[#allocation2 + $0x30] sm:$0xff]
    %v398 = vld [vmem:[#allocation2 + $0x38] sm:$0xff]
    %v399 = vld [vmem:[#allocation2 + $0x40] sm:$0xff]
    %v400 = vld [vmem:[#allocation2 + $0x48] sm:$0xff]
    %v401 = vld [vmem:[#allocation2 + $0x50] sm:$0xff]
    %v402 = vld [vmem:[#allocation2 + $0x58] sm:$0xff]
    %v403 = vld [vmem:[#allocation2 + $0x60] sm:$0xff]
    %v404 = vld [vmem:[#allocation2 + $0x68] sm:$0xff]
    %v405 = vld [vmem:[#allocation2 + $0x70] sm:$0xff]
    %v406 = vld [vmem:[#allocation2 + $0x78] sm:$0xff]
    %407 = vmax.xlane.f32.xlu0 %v375
    %v408 = vpop.xlane.xlu0 %407
    %409 = vmax.xlane.f32.xlu0 %v376
    %v410 = vpop.xlane.xlu0 %409
    %411 = vmax.xlane.f32.xlu0 %v377
    %v412 = vpop.xlane.xlu0 %411
    %413 = vmax.xlane.f32.xlu0 %v378
    %v414 = vpop.xlane.xlu0 %413
    %415 = vmax.xlane.f32.xlu0 %v379
    %v416 = vpop.xlane.xlu0 %415
    %417 = vmax.xlane.f32.xlu0 %v380
    %v418 = vpop.xlane.xlu0 %417
    %419 = vmax.xlane.f32.xlu0 %v381
    %v420 = vpop.xlane.xlu0 %419
    %421 = vmax.xlane.f32.xlu0 %v382
    %v422 = vpop.xlane.xlu0 %421
    %423 = vmax.xlane.f32.xlu0 %v383
    %v424 = vpop.xlane.xlu0 %423
    %425 = vmax.xlane.f32.xlu0 %v384
    %v426 = vpop.xlane.xlu0 %425
    %427 = vmax.xlane.f32.xlu0 %v385
    %v428 = vpop.xlane.xlu0 %427
    %429 = vmax.xlane.f32.xlu0 %v386
    %v430 = vpop.xlane.xlu0 %429
    %431 = vmax.xlane.f32.xlu0 %v387
    %v432 = vpop.xlane.xlu0 %431
    %433 = vmax.xlane.f32.xlu0 %v388
    %v434 = vpop.xlane.xlu0 %433
    %435 = vmax.xlane.f32.xlu0 %v389
    %v436 = vpop.xlane.xlu0 %435
    %437 = vmax.xlane.f32.xlu0 %v390
    %v438 = vpop.xlane.xlu0 %437
    %v439 = vmax.f32 %v391, %v408
    %v440 = vmax.f32 %v392, %v410
    %v441 = vmax.f32 %v393, %v412
    %v442 = vmax.f32 %v394, %v414
    %v443 = vmax.f32 %v395, %v416
    %v444 = vmax.f32 %v396, %v418
    %v445 = vmax.f32 %v397, %v420
    %v446 = vmax.f32 %v398, %v422
    %v447 = vmax.f32 %v399, %v424
    %v448 = vmax.f32 %v400, %v426
    %v449 = vmax.f32 %v401, %v428
    %v450 = vmax.f32 %v402, %v430
    %v451 = vmax.f32 %v403, %v432
    %v452 = vmax.f32 %v404, %v434
    %v453 = vmax.f32 %v405, %v436
    %v454 = vmax.f32 %v406, %v438
    %vm455 = vcmask 7168
    %456 = vst.msk [vmem:[#allocation2] sm:$0xff] %vm455, %v439
    %457 = vst.msk [vmem:[#allocation2 + $0x8] sm:$0xff] %vm455, %v440
    %458 = vst.msk [vmem:[#allocation2 + $0x10] sm:$0xff] %vm455, %v441
    %459 = vst.msk [vmem:[#allocation2 + $0x18] sm:$0xff] %vm455, %v442
    %460 = vst.msk [vmem:[#allocation2 + $0x20] sm:$0xff] %vm455, %v443
    %461 = vst.msk [vmem:[#allocation2 + $0x28] sm:$0xff] %vm455, %v444
    %462 = vst.msk [vmem:[#allocation2 + $0x30] sm:$0xff] %vm455, %v445
    %463 = vst.msk [vmem:[#allocation2 + $0x38] sm:$0xff] %vm455, %v446
    %464 = vst.msk [vmem:[#allocation2 + $0x40] sm:$0xff] %vm455, %v447
    %465 = vst.msk [vmem:[#allocation2 + $0x48] sm:$0xff] %vm455, %v448
    %466 = vst.msk [vmem:[#allocation2 + $0x50] sm:$0xff] %vm455, %v449
    %467 = vst.msk [vmem:[#allocation2 + $0x58] sm:$0xff] %vm455, %v450
    %468 = vst.msk [vmem:[#allocation2 + $0x60] sm:$0xff] %vm455, %v451
    %469 = vst.msk [vmem:[#allocation2 + $0x68] sm:$0xff] %vm455, %v452
    %470 = vst.msk [vmem:[#allocation2 + $0x70] sm:$0xff] %vm455, %v453
    %471 = vst.msk [vmem:[#allocation2 + $0x78] sm:$0xff] %vm455, %v454
  $region17: #{koleo_loss.1} parent=0 // pred_fallthru
    _
  %p472 = pneg %p300
  // Predicated region
  $region18: #{koleo_loss.1} parent=0 // pred_check
    _
  $region19: #{koleo_loss.1} parent=0 // pred_check_branch
    %474 = sbr.rel (%p300) target = $region21
  $region20: #{koleo_loss.1} parent=0 // pred_region
    %v475 = vld [vmem:[#allocation2] sm:$0xff]
    %v476 = vld [vmem:[#allocation2 + $0x8] sm:$0xff]
    %v477 = vld [vmem:[#allocation2 + $0x10] sm:$0xff]
    %v478 = vld [vmem:[#allocation2 + $0x18] sm:$0xff]
    %v479 = vld [vmem:[#allocation2 + $0x20] sm:$0xff]
    %v480 = vld [vmem:[#allocation2 + $0x28] sm:$0xff]
    %v481 = vld [vmem:[#allocation2 + $0x30] sm:$0xff]
    %v482 = vld [vmem:[#allocation2 + $0x38] sm:$0xff]
    %v483 = vld [vmem:[#allocation2 + $0x40] sm:$0xff]
    %v484 = vld [vmem:[#allocation2 + $0x48] sm:$0xff]
    %v485 = vld [vmem:[#allocation2 + $0x50] sm:$0xff]
    %v486 = vld [vmem:[#allocation2 + $0x58] sm:$0xff]
    %v487 = vld [vmem:[#allocation2 + $0x60] sm:$0xff]
    %v488 = vld [vmem:[#allocation2 + $0x68] sm:$0xff]
    %v489 = vld [vmem:[#allocation2 + $0x70] sm:$0xff]
    %v490 = vld [vmem:[#allocation2 + $0x78] sm:$0xff]
    %491 = vmax.xlane.f32.xlu0 %v229
    %v492 = vpop.xlane.xlu0 %491
    %493 = vmax.xlane.f32.xlu0 %v232
    %v494 = vpop.xlane.xlu0 %493
    %495 = vmax.xlane.f32.xlu0 %v237
    %v496 = vpop.xlane.xlu0 %495
    %497 = vmax.xlane.f32.xlu0 %v240
    %v498 = vpop.xlane.xlu0 %497
    %499 = vmax.xlane.f32.xlu0 %v245
    %v500 = vpop.xlane.xlu0 %499
    %501 = vmax.xlane.f32.xlu0 %v248
    %v502 = vpop.xlane.xlu0 %501
    %503 = vmax.xlane.f32.xlu0 %v253
    %v504 = vpop.xlane.xlu0 %503
    %505 = vmax.xlane.f32.xlu0 %v256
    %v506 = vpop.xlane.xlu0 %505
    %507 = vmax.xlane.f32.xlu0 %v261
    %v508 = vpop.xlane.xlu0 %507
    %509 = vmax.xlane.f32.xlu0 %v264
    %v510 = vpop.xlane.xlu0 %509
    %511 = vmax.xlane.f32.xlu0 %v269
    %v512 = vpop.xlane.xlu0 %511
    %513 = vmax.xlane.f32.xlu0 %v272
    %v514 = vpop.xlane.xlu0 %513
    %515 = vmax.xlane.f32.xlu0 %v277
    %v516 = vpop.xlane.xlu0 %515
    %517 = vmax.xlane.f32.xlu0 %v280
    %v518 = vpop.xlane.xlu0 %517
    %519 = vmax.xlane.f32.xlu0 %v285
    %v520 = vpop.xlane.xlu0 %519
    %521 = vmax.xlane.f32.xlu0 %v288
    %v522 = vpop.xlane.xlu0 %521
    %v523 = vmax.f32 %v475, %v492
    %v524 = vmax.f32 %v476, %v494
    %v525 = vmax.f32 %v477, %v496
    %v526 = vmax.f32 %v478, %v498
    %v527 = vmax.f32 %v479, %v500
    %v528 = vmax.f32 %v480, %v502
    %v529 = vmax.f32 %v481, %v504
    %v530 = vmax.f32 %v482, %v506
    %v531 = vmax.f32 %v483, %v508
    %v532 = vmax.f32 %v484, %v510
    %v533 = vmax.f32 %v485, %v512
    %v534 = vmax.f32 %v486, %v514
    %v535 = vmax.f32 %v487, %v516
    %v536 = vmax.f32 %v488, %v518
    %v537 = vmax.f32 %v489, %v520
    %v538 = vmax.f32 %v490, %v522
    %vm539 = vcmask 7168
    %540 = vst.msk [vmem:[#allocation2] sm:$0xff] %vm539, %v523
    %541 = vst.msk [vmem:[#allocation2 + $0x8] sm:$0xff] %vm539, %v524
    %542 = vst.msk [vmem:[#allocation2 + $0x10] sm:$0xff] %vm539, %v525
    %543 = vst.msk [vmem:[#allocation2 + $0x18] sm:$0xff] %vm539, %v526
    %544 = vst.msk [vmem:[#allocation2 + $0x20] sm:$0xff] %vm539, %v527
    %545 = vst.msk [vmem:[#allocation2 + $0x28] sm:$0xff] %vm539, %v528
    %546 = vst.msk [vmem:[#allocation2 + $0x30] sm:$0xff] %vm539, %v529
    %547 = vst.msk [vmem:[#allocation2 + $0x38] sm:$0xff] %vm539, %v530
    %548 = vst.msk [vmem:[#allocation2 + $0x40] sm:$0xff] %vm539, %v531
    %549 = vst.msk [vmem:[#allocation2 + $0x48] sm:$0xff] %vm539, %v532
    %550 = vst.msk [vmem:[#allocation2 + $0x50] sm:$0xff] %vm539, %v533
    %551 = vst.msk [vmem:[#allocation2 + $0x58] sm:$0xff] %vm539, %v534
    %552 = vst.msk [vmem:[#allocation2 + $0x60] sm:$0xff] %vm539, %v535
    %553 = vst.msk [vmem:[#allocation2 + $0x68] sm:$0xff] %vm539, %v536
    %554 = vst.msk [vmem:[#allocation2 + $0x70] sm:$0xff] %vm539, %v537
    %555 = vst.msk [vmem:[#allocation2 + $0x78] sm:$0xff] %vm539, %v538
  $region21: #{koleo_loss.1} parent=0 // pred_fallthru
    _
  // Predicated region
  $region22: #{koleo_loss.1} parent=0 // pred_check
    %p556 = pneg %p12
  $region23: #{koleo_loss.1} parent=0 // pred_check_branch
    %558 = sbr.rel (%p556) target = $region25
  $region24: #{koleo_loss.1} parent=0 // pred_region
    %v559 = vld [vmem:[#allocation2] sm:$0xff]
    %v560 = vld [vmem:[#allocation2 + $0x8] sm:$0xff]
    %v561 = vld [vmem:[#allocation2 + $0x10] sm:$0xff]
    %v562 = vld [vmem:[#allocation2 + $0x18] sm:$0xff]
    %v563 = vld [vmem:[#allocation2 + $0x20] sm:$0xff]
    %v564 = vld [vmem:[#allocation2 + $0x28] sm:$0xff]
    %v565 = vld [vmem:[#allocation2 + $0x30] sm:$0xff]
    %v566 = vld [vmem:[#allocation2 + $0x38] sm:$0xff]
    %v567 = vld [vmem:[#allocation2 + $0x40] sm:$0xff]
    %v568 = vld [vmem:[#allocation2 + $0x48] sm:$0xff]
    %v569 = vld [vmem:[#allocation2 + $0x50] sm:$0xff]
    %v570 = vld [vmem:[#allocation2 + $0x58] sm:$0xff]
    %v571 = vld [vmem:[#allocation2 + $0x60] sm:$0xff]
    %v572 = vld [vmem:[#allocation2 + $0x68] sm:$0xff]
    %v573 = vld [vmem:[#allocation2 + $0x70] sm:$0xff]
    %v574 = vld [vmem:[#allocation2 + $0x78] sm:$0xff]
    %v575 = vmul.f32 %v559, 2.0
    %v576 = vmul.f32 %v560, 2.0
    %v577 = vmul.f32 %v561, 2.0
    %v578 = vmul.f32 %v562, 2.0
    %v579 = vmul.f32 %v563, 2.0
    %v580 = vmul.f32 %v564, 2.0
    %v581 = vmul.f32 %v565, 2.0
    %v582 = vmul.f32 %v566, 2.0
    %v583 = vmul.f32 %v567, 2.0
    %v584 = vmul.f32 %v568, 2.0
    %v585 = vmul.f32 %v569, 2.0
    %v586 = vmul.f32 %v570, 2.0
    %v587 = vmul.f32 %v571, 2.0
    %v588 = vmul.f32 %v572, 2.0
    %v589 = vmul.f32 %v573, 2.0
    %v590 = vmul.f32 %v574, 2.0
    %v591 = vsub.f32 2.0, %v575
    %v592 = vsub.f32 2.0, %v576
    %v593 = vsub.f32 2.0, %v577
    %v594 = vsub.f32 2.0, %v578
    %v595 = vsub.f32 2.0, %v579
    %v596 = vsub.f32 2.0, %v580
    %v597 = vsub.f32 2.0, %v581
    %v598 = vsub.f32 2.0, %v582
    %v599 = vsub.f32 2.0, %v583
    %v600 = vsub.f32 2.0, %v584
    %v601 = vsub.f32 2.0, %v585
    %v602 = vsub.f32 2.0, %v586
    %v603 = vsub.f32 2.0, %v587
    %v604 = vsub.f32 2.0, %v588
    %v605 = vsub.f32 2.0, %v589
    %v606 = vsub.f32 2.0, %v590
    %v607 = vmax.f32 %v591, 0.0
    %v608 = vmax.f32 %v592, 0.0
    %v609 = vmax.f32 %v593, 0.0
    %v610 = vmax.f32 %v594, 0.0
    %v611 = vmax.f32 %v595, 0.0
    %v612 = vmax.f32 %v596, 0.0
    %v613 = vmax.f32 %v597, 0.0
    %v614 = vmax.f32 %v598, 0.0
    %v615 = vmax.f32 %v599, 0.0
    %v616 = vmax.f32 %v600, 0.0
    %v617 = vmax.f32 %v601, 0.0
    %v618 = vmax.f32 %v602, 0.0
    %v619 = vmax.f32 %v603, 0.0
    %v620 = vmax.f32 %v604, 0.0
    %v621 = vmax.f32 %v605, 0.0
    %v622 = vmax.f32 %v606, 0.0
    %v623 = vrsqrt.pop %v607
    %v624 = vmul.f32 %v607, %v623
    %vm625 = vcmp.eq.f32.partialorder %v607, inf
    %v626 = vsel %vm625, %v607, %v624
    %vm627 = vcmp.eq.f32.partialorder %v607, 0.0
    %v628 = vand.u32 %v607, 2147483648
    %v629 = vsel %vm627, %v628, %v626
    %v630 = vrsqrt.pop %v608
    %v631 = vmul.f32 %v608, %v630
    %vm632 = vcmp.eq.f32.partialorder %v608, inf
    %v633 = vsel %vm632, %v608, %v631
    %vm634 = vcmp.eq.f32.partialorder %v608, 0.0
    %v635 = vand.u32 %v608, 2147483648
    %v636 = vsel %vm634, %v635, %v633
    %v637 = vrsqrt.pop %v609
    %v638 = vmul.f32 %v609, %v637
    %vm639 = vcmp.eq.f32.partialorder %v609, inf
    %v640 = vsel %vm639, %v609, %v638
    %vm641 = vcmp.eq.f32.partialorder %v609, 0.0
    %v642 = vand.u32 %v609, 2147483648
    %v643 = vsel %vm641, %v642, %v640
    %v644 = vrsqrt.pop %v610
    %v645 = vmul.f32 %v610, %v644
    %vm646 = vcmp.eq.f32.partialorder %v610, inf
    %v647 = vsel %vm646, %v610, %v645
    %vm648 = vcmp.eq.f32.partialorder %v610, 0.0
    %v649 = vand.u32 %v610, 2147483648
    %v650 = vsel %vm648, %v649, %v647
    %v651 = vrsqrt.pop %v611
    %v652 = vmul.f32 %v611, %v651
    %vm653 = vcmp.eq.f32.partialorder %v611, inf
    %v654 = vsel %vm653, %v611, %v652
    %vm655 = vcmp.eq.f32.partialorder %v611, 0.0
    %v656 = vand.u32 %v611, 2147483648
    %v657 = vsel %vm655, %v656, %v654
    %v658 = vrsqrt.pop %v612
    %v659 = vmul.f32 %v612, %v658
    %vm660 = vcmp.eq.f32.partialorder %v612, inf
    %v661 = vsel %vm660, %v612, %v659
    %vm662 = vcmp.eq.f32.partialorder %v612, 0.0
    %v663 = vand.u32 %v612, 2147483648
    %v664 = vsel %vm662, %v663, %v661
    %v665 = vrsqrt.pop %v613
    %v666 = vmul.f32 %v613, %v665
    %vm667 = vcmp.eq.f32.partialorder %v613, inf
    %v668 = vsel %vm667, %v613, %v666
    %vm669 = vcmp.eq.f32.partialorder %v613, 0.0
    %v670 = vand.u32 %v613, 2147483648
    %v671 = vsel %vm669, %v670, %v668
    %v672 = vrsqrt.pop %v614
    %v673 = vmul.f32 %v614, %v672
    %vm674 = vcmp.eq.f32.partialorder %v614, inf
    %v675 = vsel %vm674, %v614, %v673
    %vm676 = vcmp.eq.f32.partialorder %v614, 0.0
    %v677 = vand.u32 %v614, 2147483648
    %v678 = vsel %vm676, %v677, %v675
    %v679 = vrsqrt.pop %v615
    %v680 = vmul.f32 %v615, %v679
    %vm681 = vcmp.eq.f32.partialorder %v615, inf
    %v682 = vsel %vm681, %v615, %v680
    %vm683 = vcmp.eq.f32.partialorder %v615, 0.0
    %v684 = vand.u32 %v615, 2147483648
    %v685 = vsel %vm683, %v684, %v682
    %v686 = vrsqrt.pop %v616
    %v687 = vmul.f32 %v616, %v686
    %vm688 = vcmp.eq.f32.partialorder %v616, inf
    %v689 = vsel %vm688, %v616, %v687
    %vm690 = vcmp.eq.f32.partialorder %v616, 0.0
    %v691 = vand.u32 %v616, 2147483648
    %v692 = vsel %vm690, %v691, %v689
    %v693 = vrsqrt.pop %v617
    %v694 = vmul.f32 %v617, %v693
    %vm695 = vcmp.eq.f32.partialorder %v617, inf
    %v696 = vsel %vm695, %v617, %v694
    %vm697 = vcmp.eq.f32.partialorder %v617, 0.0
    %v698 = vand.u32 %v617, 2147483648
    %v699 = vsel %vm697, %v698, %v696
    %v700 = vrsqrt.pop %v618
    %v701 = vmul.f32 %v618, %v700
    %vm702 = vcmp.eq.f32.partialorder %v618, inf
    %v703 = vsel %vm702, %v618, %v701
    %vm704 = vcmp.eq.f32.partialorder %v618, 0.0
    %v705 = vand.u32 %v618, 2147483648
    %v706 = vsel %vm704, %v705, %v703
    %v707 = vrsqrt.pop %v619
    %v708 = vmul.f32 %v619, %v707
    %vm709 = vcmp.eq.f32.partialorder %v619, inf
    %v710 = vsel %vm709, %v619, %v708
    %vm711 = vcmp.eq.f32.partialorder %v619, 0.0
    %v712 = vand.u32 %v619, 2147483648
    %v713 = vsel %vm711, %v712, %v710
    %v714 = vrsqrt.pop %v620
    %v715 = vmul.f32 %v620, %v714
    %vm716 = vcmp.eq.f32.partialorder %v620, inf
    %v717 = vsel %vm716, %v620, %v715
    %vm718 = vcmp.eq.f32.partialorder %v620, 0.0
    %v719 = vand.u32 %v620, 2147483648
    %v720 = vsel %vm718, %v719, %v717
    %v721 = vrsqrt.pop %v621
    %v722 = vmul.f32 %v621, %v721
    %vm723 = vcmp.eq.f32.partialorder %v621, inf
    %v724 = vsel %vm723, %v621, %v722
    %vm725 = vcmp.eq.f32.partialorder %v621, 0.0
    %v726 = vand.u32 %v621, 2147483648
    %v727 = vsel %vm725, %v726, %v724
    %v728 = vrsqrt.pop %v622
    %v729 = vmul.f32 %v622, %v728
    %vm730 = vcmp.eq.f32.partialorder %v622, inf
    %v731 = vsel %vm730, %v622, %v729
    %vm732 = vcmp.eq.f32.partialorder %v622, 0.0
    %v733 = vand.u32 %v622, 2147483648
    %v734 = vsel %vm732, %v733, %v731
    %v735 = vadd.f32 %v629, 1e-08
    %v736 = vadd.f32 %v636, 1e-08
    %v737 = vadd.f32 %v643, 1e-08
    %v738 = vadd.f32 %v650, 1e-08
    %v739 = vadd.f32 %v657, 1e-08
    %v740 = vadd.f32 %v664, 1e-08
    %v741 = vadd.f32 %v671, 1e-08
    %v742 = vadd.f32 %v678, 1e-08
    %v743 = vadd.f32 %v685, 1e-08
    %v744 = vadd.f32 %v692, 1e-08
    %v745 = vadd.f32 %v699, 1e-08
    %v746 = vadd.f32 %v706, 1e-08
    %v747 = vadd.f32 %v713, 1e-08
    %v748 = vadd.f32 %v720, 1e-08
    %v749 = vadd.f32 %v727, 1e-08
    %v750 = vadd.f32 %v734, 1e-08
    %v751 = vlog2.pop %v735
    %v752 = vmul.f32 %v751, 0.6931472
    %v753 = vlog2.pop %v736
    %v754 = vmul.f32 %v753, 0.6931472
    %v755 = vlog2.pop %v737
    %v756 = vmul.f32 %v755, 0.6931472
    %v757 = vlog2.pop %v738
    %v758 = vmul.f32 %v757, 0.6931472
    %v759 = vlog2.pop %v739
    %v760 = vmul.f32 %v759, 0.6931472
    %v761 = vlog2.pop %v740
    %v762 = vmul.f32 %v761, 0.6931472
    %v763 = vlog2.pop %v741
    %v764 = vmul.f32 %v763, 0.6931472
    %v765 = vlog2.pop %v742
    %v766 = vmul.f32 %v765, 0.6931472
    %v767 = vlog2.pop %v743
    %v768 = vmul.f32 %v767, 0.6931472
    %v769 = vlog2.pop %v744
    %v770 = vmul.f32 %v769, 0.6931472
    %v771 = vlog2.pop %v745
    %v772 = vmul.f32 %v771, 0.6931472
    %v773 = vlog2.pop %v746
    %v774 = vmul.f32 %v773, 0.6931472
    %v775 = vlog2.pop %v747
    %v776 = vmul.f32 %v775, 0.6931472
    %v777 = vlog2.pop %v748
    %v778 = vmul.f32 %v777, 0.6931472
    %v779 = vlog2.pop %v749
    %v780 = vmul.f32 %v779, 0.6931472
    %v781 = vlog2.pop %v750
    %v782 = vmul.f32 %v781, 0.6931472
    %v783 = vsub.f32 0.0, %v752
    %v784 = vsub.f32 0.0, %v754
    %v785 = vsub.f32 0.0, %v756
    %v786 = vsub.f32 0.0, %v758
    %v787 = vsub.f32 0.0, %v760
    %v788 = vsub.f32 0.0, %v762
    %v789 = vsub.f32 0.0, %v764
    %v790 = vsub.f32 0.0, %v766
    %v791 = vsub.f32 0.0, %v768
    %v792 = vsub.f32 0.0, %v770
    %v793 = vsub.f32 0.0, %v772
    %v794 = vsub.f32 0.0, %v774
    %v795 = vsub.f32 0.0, %v776
    %v796 = vsub.f32 0.0, %v778
    %v797 = vsub.f32 0.0, %v780
    %v798 = vsub.f32 0.0, %v782
    %vm799 = vcmask 7168
    %800 = vst.msk [vmem:[%s2] sm:$0xff] %vm799, %v783
    %801 = vst.msk [vmem:[%s2 + $0x8] sm:$0xff] %vm799, %v784
    %802 = vst.msk [vmem:[%s2 + $0x10] sm:$0xff] %vm799, %v785
    %803 = vst.msk [vmem:[%s2 + $0x18] sm:$0xff] %vm799, %v786
    %804 = vst.msk [vmem:[%s2 + $0x20] sm:$0xff] %vm799, %v787
    %805 = vst.msk [vmem:[%s2 + $0x28] sm:$0xff] %vm799, %v788
    %806 = vst.msk [vmem:[%s2 + $0x30] sm:$0xff] %vm799, %v789
    %807 = vst.msk [vmem:[%s2 + $0x38] sm:$0xff] %vm799, %v790
    %808 = vst.msk [vmem:[%s2 + $0x40] sm:$0xff] %vm799, %v791
    %809 = vst.msk [vmem:[%s2 + $0x48] sm:$0xff] %vm799, %v792
    %810 = vst.msk [vmem:[%s2 + $0x50] sm:$0xff] %vm799, %v793
    %811 = vst.msk [vmem:[%s2 + $0x58] sm:$0xff] %vm799, %v794
    %812 = vst.msk [vmem:[%s2 + $0x60] sm:$0xff] %vm799, %v795
    %813 = vst.msk [vmem:[%s2 + $0x68] sm:$0xff] %vm799, %v796
    %814 = vst.msk [vmem:[%s2 + $0x70] sm:$0xff] %vm799, %v797
    %815 = vst.msk [vmem:[%s2 + $0x78] sm:$0xff] %vm799, %v798
  $region25: #{koleo_loss.1} parent=0 // pred_fallthru
    _
  // Predicated region
  $region26: #{koleo_loss.1} parent=0 // pred_check
    _
  $region27: #{koleo_loss.1} parent=0 // pred_check_branch
    %817 = sbr.rel (0) target = $region29
  $region28: #{koleo_loss.1} parent=0 // pred_region
    _
  $region29: #{koleo_loss.1} parent=0 // pred_fallthru
    _
  // Predicated region
  $region30: #{koleo_loss.1} parent=0 // pred_check
    _
  $region31: #{koleo_loss.1} parent=0 // pred_check_branch
    %819 = sbr.rel (0) target = $region33
  $region32: #{koleo_loss.1} parent=0 // pred_region
    _
  $region33: #{koleo_loss.1} parent=0 // pred_fallthru
    _

</llo_original>
